<compile_context>
chip_gen: v6e
topology: v6e:2x2x1
jax: 0.10.0
libtpu: 0.0.40
codegen_flags: <defaults>
</compile_context>

<pallas_src>
import jax
import jax.numpy as jnp
from jax import lax
from jax.experimental import pallas as pl
from jax.experimental.pallas import tpu as pltpu


def _sobel_kernel(x_ref, halo_ref, o_ref):
    # x_ref   : (TH, W)  row slab of the image
    # halo_ref: (2, W)   row just above / just below the slab
    #                    (zeros at the image borders)
    # o_ref   : (TH, W)  un-normalized edge magnitude
    TH, W = x_ref.shape

    # Column-boundary masks, computed once at (1, W) and broadcast.
    col = lax.broadcasted_iota(jnp.int32, (1, W), 1)
    mask_l = col == 0
    mask_r = col == (W - 1)

    def stencil(xu, xc, xd):
        # Separable Sobel given the three row neighbours; zero padding in j
        # is realized by masking the wrapped lane of each roll.
        r_d = xu - xd                 # feeds horizontal kernel [1, 2, 1]
        r_s = xu + 2.0 * xc + xd      # feeds vertical kernel   [1, 0, -1]
        rd_l = jnp.where(mask_l, 0.0, pltpu.roll(r_d, 1, axis=1))      # j-1
        rd_r = jnp.where(mask_r, 0.0, pltpu.roll(r_d, W - 1, axis=1))  # j+1
        rs_l = jnp.where(mask_l, 0.0, pltpu.roll(r_s, 1, axis=1))
        rs_r = jnp.where(mask_r, 0.0, pltpu.roll(r_s, W - 1, axis=1))
        h = rd_l + 2.0 * r_d + rd_r
        v = rs_l - rs_r
        return jnp.sqrt(h * h + v * v)

    # Bulk of the slab: row neighbours via sublane rolls (XLU slot), using
    # only NON-NEGATIVE shifts.  Rows 0 / TH-1 of xu / xd are wrapped values;
    # instead of masking the whole tile, those two output rows are recomputed
    # below and overwritten.
    x = x_ref[...]
    xu = pltpu.roll(x, 1, axis=0)         # x[i-1, :]  (wrong at i = 0)
    xd = pltpu.roll(x, TH - 1, axis=0)    # x[i+1, :]  (wrong at i = TH-1)
    o_ref[...] = stencil(xu, x, xd)

    # Boundary-row fix-up: tiny (1, W) recomputation using the halo rows.
    top = halo_ref[0:1, :]                # row above the slab (zeros at top)
    bot = halo_ref[1:2, :]                # row below the slab (zeros at bot)
    o_ref[0:1, :] = stencil(top, x_ref[0:1, :], x_ref[1:2, :])
    o_ref[TH - 1:TH, :] = stencil(x_ref[TH - 2:TH - 1, :],
                                  x_ref[TH - 1:TH, :], bot)


def _plan_rows(H: int, W: int, itemsize: int, batch: int):
    """Pick the row-slab size TH (multiple of 8, >= 8) and the padded row
    count H_pad (multiple of TH).  One (TH, W) tile targets ~2 MiB so the
    per-grid-step overhead is amortized, while the pipelined working set
    (~14 tiles) stays far below v7x's 64 MiB physical VMEM."""
    row_bytes = max(1, W * itemsize)
    target = 2 << 20        # ~2 MiB slab: ~85% of HBM roofline territory
    max_tile = 3 << 20      # 14x working set stays under the 48 MiB cap
    h8 = ((H + 7) // 8) * 8
    divs = [th for th in range(8, h8 + 1, 8)
            if h8 % th == 0 and th * row_bytes <= max_tile]
    if divs:
        under = [th for th in divs if th * row_bytes <= target]
        th, h_pad = (max(under) if under else min(divs)), h8
    else:
        # Awkward (very wide) shapes: pad H so a near-target slab divides it.
        th = max(8, min(h8, (target // row_bytes) // 8 * 8))
        h_pad = ((h8 + th - 1) // th) * th
    # v7x shards "parallel" grid axes across 2 TensorCores; make sure there
    # are at least two grid steps to feed them.
    if batch * (h_pad // th) < 2 and th % 16 == 0:
        th //= 2
    return th, h_pad


def edge_detector(x: jax.Array) -> jax.Array:
    """x: (B, 1, H, W) float in [0, 1]  ->  (B, 1, H, W) edge map."""
    assert x.shape[1] == 1, "EdgeDetector expects B&W images (C == 1)"
    B, _, H, W = x.shape
    dtype = x.dtype
    itemsize = jnp.dtype(dtype).itemsize
    x2d = x[:, 0, :, :]                                     # (B, H, W)

    TH, H_pad = _plan_rows(H, W, itemsize, B)
    if H_pad != H:
        x2d = jnp.pad(x2d, ((0, 0), (0, H_pad - H), (0, 0)))
    nS = H_pad // TH

    # One (2, W) halo per slab: [s, 0] = row just above the slab (zeros for
    # the first slab), [s, 1] = row just below (zeros for the last slab).
    # Tiny (B, nS, 2, W) side array -> ~2/TH of the image in extra HBM reads
    # instead of writing + re-reading a full padded copy of the image.
    zrow = jnp.zeros((B, 1, W), dtype)
    if nS > 1:
        top = jnp.concatenate([zrow, x2d[:, TH - 1:H_pad - 1:TH, :]], axis=1)
        bot = jnp.concatenate([x2d[:, TH::TH, :], zrow], axis=1)
    else:
        top, bot = zrow, zrow
    halo = jnp.stack([top, bot], axis=2)                    # (B, nS, 2, W)

    tile_bytes = TH * W * itemsize
    # Double-buffered in/out tiles + halos + headroom for temporaries; capped
    # well below one v7x TensorCore's 64 MiB of physical VMEM.
    vmem_limit = int(min(48 << 20,
                         max(16 << 20, 14 * tile_bytes + 8 * W * itemsize)))

    out = pl.pallas_call(
        _sobel_kernel,
        out_shape=jax.ShapeDtypeStruct((B, H_pad, W), dtype),
        grid_spec=pltpu.PrefetchScalarGridSpec(
            num_scalar_prefetch=0,
            grid=(B, nS),
            in_specs=[
                pl.BlockSpec((None, TH, W), lambda b, i: (b, i, 0)),
                pl.BlockSpec((None, None, 2, W), lambda b, i: (b, i, 0, 0)),
            ],
            out_specs=pl.BlockSpec((None, TH, W), lambda b, i: (b, i, 0)),
        ),
        compiler_params=pltpu.CompilerParams(
            dimension_semantics=("parallel", "parallel"),
            vmem_limit_bytes=vmem_limit),
    )(x2d, halo)

    if H_pad != H:
        out = out[:, :H, :]
    return out[:, None, :, :]                               # (B, 1, H, W)


def _reference(x: jax.Array) -> jax.Array:
    # Pure-JAX reference (same math, no Pallas) for a correctness check.
    x2d = x[:, 0, :, :]
    xp = jnp.pad(x2d, ((0, 0), (1, 1), (1, 1)))
    H, W = x.shape[2], x.shape[3]

    def win(di, dj):
        return xp[:, di:di + H, dj:dj + W]

    h = (win(0, 0) + 2.0 * win(0, 1) + win(0, 2)
         - win(2, 0) - 2.0 * win(2, 1) - win(2, 2))
    v = (win(0, 0) - win(0, 2)
         + 2.0 * win(1, 0) - 2.0 * win(1, 2)
         + win(2, 0) - win(2, 2))
    return jnp.sqrt(h * h + v * v)[:, None, :, :]


if __name__ == "__main__":
    key = jax.random.PRNGKey(0)
    B, C, H, W = 2, 1, 16, 16
    x = jax.random.uniform(key, (B, C, H, W), dtype=jnp.float32)  # in [0, 1)

    emap = jax.block_until_ready(edge_detector(x))

    ref = _reference(x)
    assert emap.shape == (B, C, H, W)
    assert jnp.allclose(emap, ref, atol=1e-5, rtol=1e-5)

    print("KERNEL_OK")
</pallas_src>

<mosaic_0001>
module attributes {stable_mosaic.version = 11 : i64} {
  func.func @_sobel_kernel(%arg0: i32, %arg1: i32, %arg2: memref<1x16x16xf32, #tpu.memory_space<vmem>>, %arg3: memref<1x1x2x16xf32, #tpu.memory_space<vmem>>, %arg4: memref<1x16x16xf32, #tpu.memory_space<vmem>>) attributes {dimension_semantics = [#tpu.dimension_semantics<parallel>, #tpu.dimension_semantics<parallel>], iteration_bounds = array<i64: 2, 1>, scalar_prefetch = 0 : i64, scratch_operands = 0 : i64, tpu.core_type = #tpu.core_type<tc>, window_params = [{transform_indices = @transform_0, window_bounds = array<i64: 1, 16, 16>}, {transform_indices = @transform_1, window_bounds = array<i64: 1, 1, 2, 16>}, {transform_indices = @transform_2, window_bounds = array<i64: 1, 16, 16>}]} {
    %0 = tpu.iota {dimensions = array<i32: 1>} : vector<1x16xi32>
    %c0_i32 = arith.constant 0 : i32
    %1 = vector.broadcast %c0_i32 : i32 to vector<1x16xi32>
    %2 = arith.cmpi eq, %0, %1 : vector<1x16xi32>
    %c15_i32 = arith.constant 15 : i32
    %3 = vector.broadcast %c15_i32 : i32 to vector<1x16xi32>
    %4 = arith.cmpi eq, %0, %3 : vector<1x16xi32>
    %c0 = arith.constant 0 : index
    %c0_0 = arith.constant 0 : index
    %c0_1 = arith.constant 0 : index
    %5 = vector.load %arg2[%c0, %c0_0, %c0_1] : memref<1x16x16xf32, #tpu.memory_space<vmem>>, vector<1x16x16xf32>
    %6 = vector.shape_cast %5 : vector<1x16x16xf32> to vector<16x16xf32>
    %c1_i32 = arith.constant 1 : i32
    %7 = tpu.dynamic_rotate %6 by %c1_i32 dim 0 : vector<16x16xf32>, i32 -> vector<16x16xf32>
    %c15_i32_2 = arith.constant 15 : i32
    %8 = tpu.dynamic_rotate %6 by %c15_i32_2 dim 0 : vector<16x16xf32>, i32 -> vector<16x16xf32>
    %9 = arith.subf %7, %8 : vector<16x16xf32>
    %cst = arith.constant 2.000000e+00 : f32
    %10 = vector.broadcast %cst : f32 to vector<16x16xf32>
    %11 = arith.mulf %10, %6 : vector<16x16xf32>
    %12 = arith.addf %7, %11 : vector<16x16xf32>
    %13 = arith.addf %12, %8 : vector<16x16xf32>
    %c1_i32_3 = arith.constant 1 : i32
    %14 = tpu.dynamic_rotate %9 by %c1_i32_3 dim 1 : vector<16x16xf32>, i32 -> vector<16x16xf32>
    %cst_4 = arith.constant 0.000000e+00 : f32
    %15 = vector.shape_cast %2 : vector<1x16xi1> to vector<1x16xi1>
    %16 = vector.broadcast %15 : vector<1x16xi1> to vector<16x16xi1>
    %17 = vector.broadcast %cst_4 : f32 to vector<16x16xf32>
    %18 = arith.select %16, %17, %14 : vector<16x16xi1>, vector<16x16xf32>
    %c15_i32_5 = arith.constant 15 : i32
    %19 = tpu.dynamic_rotate %9 by %c15_i32_5 dim 1 : vector<16x16xf32>, i32 -> vector<16x16xf32>
    %cst_6 = arith.constant 0.000000e+00 : f32
    %20 = vector.shape_cast %4 : vector<1x16xi1> to vector<1x16xi1>
    %21 = vector.broadcast %20 : vector<1x16xi1> to vector<16x16xi1>
    %22 = vector.broadcast %cst_6 : f32 to vector<16x16xf32>
    %23 = arith.select %21, %22, %19 : vector<16x16xi1>, vector<16x16xf32>
    %c1_i32_7 = arith.constant 1 : i32
    %24 = tpu.dynamic_rotate %13 by %c1_i32_7 dim 1 : vector<16x16xf32>, i32 -> vector<16x16xf32>
    %cst_8 = arith.constant 0.000000e+00 : f32
    %25 = vector.shape_cast %2 : vector<1x16xi1> to vector<1x16xi1>
    %26 = vector.broadcast %25 : vector<1x16xi1> to vector<16x16xi1>
    %27 = vector.broadcast %cst_8 : f32 to vector<16x16xf32>
    %28 = arith.select %26, %27, %24 : vector<16x16xi1>, vector<16x16xf32>
    %c15_i32_9 = arith.constant 15 : i32
    %29 = tpu.dynamic_rotate %13 by %c15_i32_9 dim 1 : vector<16x16xf32>, i32 -> vector<16x16xf32>
    %cst_10 = arith.constant 0.000000e+00 : f32
    %30 = vector.shape_cast %4 : vector<1x16xi1> to vector<1x16xi1>
    %31 = vector.broadcast %30 : vector<1x16xi1> to vector<16x16xi1>
    %32 = vector.broadcast %cst_10 : f32 to vector<16x16xf32>
    %33 = arith.select %31, %32, %29 : vector<16x16xi1>, vector<16x16xf32>
    %cst_11 = arith.constant 2.000000e+00 : f32
    %34 = vector.broadcast %cst_11 : f32 to vector<16x16xf32>
    %35 = arith.mulf %34, %9 : vector<16x16xf32>
    %36 = arith.addf %18, %35 : vector<16x16xf32>
    %37 = arith.addf %36, %23 : vector<16x16xf32>
    %38 = arith.subf %28, %33 : vector<16x16xf32>
    %39 = arith.mulf %37, %37 : vector<16x16xf32>
    %40 = arith.mulf %38, %38 : vector<16x16xf32>
    %41 = arith.addf %39, %40 : vector<16x16xf32>
    %42 = math.sqrt %41 : vector<16x16xf32>
    %c0_12 = arith.constant 0 : index
    %c0_13 = arith.constant 0 : index
    %c0_14 = arith.constant 0 : index
    %43 = vector.load %arg4[%c0_12, %c0_13, %c0_14] : memref<1x16x16xf32, #tpu.memory_space<vmem>>, vector<1x16x16xf32>
    %44 = vector.shape_cast %43 : vector<1x16x16xf32> to vector<16x16xf32>
    %45 = vector.shape_cast %42 : vector<16x16xf32> to vector<1x16x16xf32>
    tpu.vector_store %arg4[%c0_12, %c0_13, %c0_14], %45 {strides = array<i32>} : memref<1x16x16xf32, #tpu.memory_space<vmem>>, vector<1x16x16xf32>,
    %c0_15 = arith.constant 0 : index
    %c0_16 = arith.constant 0 : index
    %c0_17 = arith.constant 0 : index
    %c0_18 = arith.constant 0 : index
    %46 = vector.load %arg3[%c0_15, %c0_16, %c0_17, %c0_18] : memref<1x1x2x16xf32, #tpu.memory_space<vmem>>, vector<1x1x1x16xf32>
    %47 = vector.shape_cast %46 : vector<1x1x1x16xf32> to vector<1x16xf32>
    %c0_19 = arith.constant 0 : index
    %c0_20 = arith.constant 0 : index
    %c1 = arith.constant 1 : index
    %c0_21 = arith.constant 0 : index
    %48 = vector.load %arg3[%c0_19, %c0_20, %c1, %c0_21] : memref<1x1x2x16xf32, #tpu.memory_space<vmem>>, vector<1x1x1x16xf32>
    %49 = vector.shape_cast %48 : vector<1x1x1x16xf32> to vector<1x16xf32>
    %c0_22 = arith.constant 0 : index
    %c0_23 = arith.constant 0 : index
    %c0_24 = arith.constant 0 : index
    %50 = vector.load %arg2[%c0_22, %c0_23, %c0_24] : memref<1x16x16xf32, #tpu.memory_space<vmem>>, vector<1x1x16xf32>
    %51 = vector.shape_cast %50 : vector<1x1x16xf32> to vector<1x16xf32>
    %c0_25 = arith.constant 0 : index
    %c1_26 = arith.constant 1 : index
    %c0_27 = arith.constant 0 : index
    %52 = vector.load %arg2[%c0_25, %c1_26, %c0_27] : memref<1x16x16xf32, #tpu.memory_space<vmem>>, vector<1x1x16xf32>
    %53 = vector.shape_cast %52 : vector<1x1x16xf32> to vector<1x16xf32>
    %54 = arith.subf %47, %53 : vector<1x16xf32>
    %cst_28 = arith.constant 2.000000e+00 : f32
    %55 = vector.broadcast %cst_28 : f32 to vector<1x16xf32>
    %56 = arith.mulf %55, %51 : vector<1x16xf32>
    %57 = arith.addf %47, %56 : vector<1x16xf32>
    %58 = arith.addf %57, %53 : vector<1x16xf32>
    %c1_i32_29 = arith.constant 1 : i32
    %59 = tpu.dynamic_rotate %54 by %c1_i32_29 dim 1 : vector<1x16xf32>, i32 -> vector<1x16xf32>
    %cst_30 = arith.constant 0.000000e+00 : f32
    %60 = vector.broadcast %cst_30 : f32 to vector<1x16xf32>
    %61 = arith.select %2, %60, %59 : vector<1x16xi1>, vector<1x16xf32>
    %c15_i32_31 = arith.constant 15 : i32
    %62 = tpu.dynamic_rotate %54 by %c15_i32_31 dim 1 : vector<1x16xf32>, i32 -> vector<1x16xf32>
    %cst_32 = arith.constant 0.000000e+00 : f32
    %63 = vector.broadcast %cst_32 : f32 to vector<1x16xf32>
    %64 = arith.select %4, %63, %62 : vector<1x16xi1>, vector<1x16xf32>
    %c1_i32_33 = arith.constant 1 : i32
    %65 = tpu.dynamic_rotate %58 by %c1_i32_33 dim 1 : vector<1x16xf32>, i32 -> vector<1x16xf32>
    %cst_34 = arith.constant 0.000000e+00 : f32
    %66 = vector.broadcast %cst_34 : f32 to vector<1x16xf32>
    %67 = arith.select %2, %66, %65 : vector<1x16xi1>, vector<1x16xf32>
    %c15_i32_35 = arith.constant 15 : i32
    %68 = tpu.dynamic_rotate %58 by %c15_i32_35 dim 1 : vector<1x16xf32>, i32 -> vector<1x16xf32>
    %cst_36 = arith.constant 0.000000e+00 : f32
    %69 = vector.broadcast %cst_36 : f32 to vector<1x16xf32>
    %70 = arith.select %4, %69, %68 : vector<1x16xi1>, vector<1x16xf32>
    %cst_37 = arith.constant 2.000000e+00 : f32
    %71 = vector.broadcast %cst_37 : f32 to vector<1x16xf32>
    %72 = arith.mulf %71, %54 : vector<1x16xf32>
    %73 = arith.addf %61, %72 : vector<1x16xf32>
    %74 = arith.addf %73, %64 : vector<1x16xf32>
    %75 = arith.subf %67, %70 : vector<1x16xf32>
    %76 = arith.mulf %74, %74 : vector<1x16xf32>
    %77 = arith.mulf %75, %75 : vector<1x16xf32>
    %78 = arith.addf %76, %77 : vector<1x16xf32>
    %79 = math.sqrt %78 : vector<1x16xf32>
    %c0_38 = arith.constant 0 : index
    %c0_39 = arith.constant 0 : index
    %c0_40 = arith.constant 0 : index
    %80 = vector.load %arg4[%c0_38, %c0_39, %c0_40] : memref<1x16x16xf32, #tpu.memory_space<vmem>>, vector<1x1x16xf32>
    %81 = vector.shape_cast %80 : vector<1x1x16xf32> to vector<1x16xf32>
    %82 = vector.shape_cast %79 : vector<1x16xf32> to vector<1x1x16xf32>
    tpu.vector_store %arg4[%c0_38, %c0_39, %c0_40], %82 {strides = array<i32>} : memref<1x16x16xf32, #tpu.memory_space<vmem>>, vector<1x1x16xf32>,
    %c0_41 = arith.constant 0 : index
    %c14 = arith.constant 14 : index
    %c0_42 = arith.constant 0 : index
    %83 = vector.load %arg2[%c0_41, %c14, %c0_42] : memref<1x16x16xf32, #tpu.memory_space<vmem>>, vector<1x1x16xf32>
    %84 = vector.shape_cast %83 : vector<1x1x16xf32> to vector<1x16xf32>
    %c0_43 = arith.constant 0 : index
    %c15 = arith.constant 15 : index
    %c0_44 = arith.constant 0 : index
    %85 = vector.load %arg2[%c0_43, %c15, %c0_44] : memref<1x16x16xf32, #tpu.memory_space<vmem>>, vector<1x1x16xf32>
    %86 = vector.shape_cast %85 : vector<1x1x16xf32> to vector<1x16xf32>
    %87 = arith.subf %84, %49 : vector<1x16xf32>
    %cst_45 = arith.constant 2.000000e+00 : f32
    %88 = vector.broadcast %cst_45 : f32 to vector<1x16xf32>
    %89 = arith.mulf %88, %86 : vector<1x16xf32>
    %90 = arith.addf %84, %89 : vector<1x16xf32>
    %91 = arith.addf %90, %49 : vector<1x16xf32>
    %c1_i32_46 = arith.constant 1 : i32
    %92 = tpu.dynamic_rotate %87 by %c1_i32_46 dim 1 : vector<1x16xf32>, i32 -> vector<1x16xf32>
    %cst_47 = arith.constant 0.000000e+00 : f32
    %93 = vector.broadcast %cst_47 : f32 to vector<1x16xf32>
    %94 = arith.select %2, %93, %92 : vector<1x16xi1>, vector<1x16xf32>
    %c15_i32_48 = arith.constant 15 : i32
    %95 = tpu.dynamic_rotate %87 by %c15_i32_48 dim 1 : vector<1x16xf32>, i32 -> vector<1x16xf32>
    %cst_49 = arith.constant 0.000000e+00 : f32
    %96 = vector.broadcast %cst_49 : f32 to vector<1x16xf32>
    %97 = arith.select %4, %96, %95 : vector<1x16xi1>, vector<1x16xf32>
    %c1_i32_50 = arith.constant 1 : i32
    %98 = tpu.dynamic_rotate %91 by %c1_i32_50 dim 1 : vector<1x16xf32>, i32 -> vector<1x16xf32>
    %cst_51 = arith.constant 0.000000e+00 : f32
    %99 = vector.broadcast %cst_51 : f32 to vector<1x16xf32>
    %100 = arith.select %2, %99, %98 : vector<1x16xi1>, vector<1x16xf32>
    %c15_i32_52 = arith.constant 15 : i32
    %101 = tpu.dynamic_rotate %91 by %c15_i32_52 dim 1 : vector<1x16xf32>, i32 -> vector<1x16xf32>
    %cst_53 = arith.constant 0.000000e+00 : f32
    %102 = vector.broadcast %cst_53 : f32 to vector<1x16xf32>
    %103 = arith.select %4, %102, %101 : vector<1x16xi1>, vector<1x16xf32>
    %cst_54 = arith.constant 2.000000e+00 : f32
    %104 = vector.broadcast %cst_54 : f32 to vector<1x16xf32>
    %105 = arith.mulf %104, %87 : vector<1x16xf32>
    %106 = arith.addf %94, %105 : vector<1x16xf32>
    %107 = arith.addf %106, %97 : vector<1x16xf32>
    %108 = arith.subf %100, %103 : vector<1x16xf32>
    %109 = arith.mulf %107, %107 : vector<1x16xf32>
    %110 = arith.mulf %108, %108 : vector<1x16xf32>
    %111 = arith.addf %109, %110 : vector<1x16xf32>
    %112 = math.sqrt %111 : vector<1x16xf32>
    %c0_55 = arith.constant 0 : index
    %c15_56 = arith.constant 15 : index
    %c0_57 = arith.constant 0 : index
    %113 = vector.load %arg4[%c0_55, %c15_56, %c0_57] : memref<1x16x16xf32, #tpu.memory_space<vmem>>, vector<1x1x16xf32>
    %114 = vector.shape_cast %113 : vector<1x1x16xf32> to vector<1x16xf32>
    %115 = vector.shape_cast %112 : vector<1x16xf32> to vector<1x1x16xf32>
    tpu.vector_store %arg4[%c0_55, %c15_56, %c0_57], %115 {strides = array<i32>} : memref<1x16x16xf32, #tpu.memory_space<vmem>>, vector<1x1x16xf32>,
    return
  }
  func.func @transform_0(%arg0: i32, %arg1: i32) -> (i32, i32, i32) {
    %c0_i32 = arith.constant 0 : i32
    %c0_i32_0 = arith.constant 0 : i32
    return %arg0, %arg1, %c0_i32 : i32, i32, i32
  }
  func.func @transform_1(%arg0: i32, %arg1: i32) -> (i32, i32, i32, i32) {
    %c0_i32 = arith.constant 0 : i32
    %c0_i32_0 = arith.constant 0 : i32
    %c0_i32_1 = arith.constant 0 : i32
    return %arg0, %arg1, %c0_i32, %c0_i32_0 : i32, i32, i32, i32
  }
  func.func @transform_2(%arg0: i32, %arg1: i32) -> (i32, i32, i32) {
    %c0_i32 = arith.constant 0 : i32
    %c0_i32_0 = arith.constant 0 : i32
    return %arg0, %arg1, %c0_i32 : i32, i32, i32
  }
}

</mosaic_0001>

<llo_original>
// kernel: tpu_custom_call.1
$region0: #{tpu_custom_call.1}
  #allocation0 [shape = 'u32[]', space=smem, size = 0x4, offset = 0x4, fixed_abs, tag = 'smem constant byte address 0x4 - core index']
  #allocation1 [shape = 'u32[144,128]{1,0:T(1,128)}', space=vmem, size = 0x12000, scoped, tag = 'internal scratch']
  %s0 = inlined_call_operand.hbm [shape: f32[2,16,16], index: 0, kind: input, shape index: {}]
  %s1 = inlined_call_operand.hbm [shape: f32[2,1,2,16], index: 1, kind: input, shape index: {}]
  %s2 = inlined_call_operand.hbm [shape: f32[2,16,16], index: 2, kind: output, shape index: {}]
  %s3 = sld [smem:[#allocation0]]
  $region49: #{tpu_custom_call.1} parent=0
    _
  %s5 = ssub.s32 1, %s3
  %s6 = scalar_select 0, %s5, %s3
  $region1: #{tpu_custom_call.1} parent=0
    #allocation2 [shape = 'u8[16384]{0}', space=vmem, size = 0x4000, scoped, tag = 'input window, operand 0']
    #allocation3 [shape = 's32[2]{0}', space=sflag, size = 0x8, scoped, tag = 'scoped memory for tpu_custom_call.1']
    #allocation4 [shape = 's32[2]{0}', space=sflag, size = 0x8, scoped, tag = 'scoped memory for tpu_custom_call.1']
    #allocation5 [shape = 'u8[2048]{0}', space=vmem, size = 0x800, scoped, tag = 'input window, operand 1']
    #allocation6 [shape = 's32[2]{0}', space=sflag, size = 0x8, scoped, tag = 'scoped memory for tpu_custom_call.1']
    #allocation7 [shape = 'u8[16384]{0}', space=vmem, size = 0x4000, scoped, tag = 'output window, operand 0']
    %7 = vsyncpa [#allocation3], 0
    %s8 = scalar_lea.sflag [#allocation3], 1
    %9 = vsyncpa %s8, 0
    %10 = vsyncpa [#allocation6], 0
    %s11 = scalar_lea.sflag [#allocation6], 1
    %12 = vsyncpa %s11, 0
    %13 = vsyncpa [#allocation4], 0
    %s14 = scalar_lea.sflag [#allocation4], 1
    %15 = vsyncpa %s14, 0
    loop: start=0, step=1, limit=4
    $region2: #{tpu_custom_call.1} parent=1 // loop_pre_header
      _
    $region3: #{tpu_custom_call.1} parent=1 // loop_header
      %s17 = sphi 0, %s21
      %p18 = scmp.ge.s32.totalorder %s17, 4
      %s24 = sphi 0, %s36
      %s25 = sphi 0, %s32
      %s26 = sphi 0, %s24
      %s27 = sphi 0, %s25
      %s28 = sphi 0, %s26
      %s29 = sphi 0, %s27
      %s41 = sphi 0, %s43
      %s44 = sphi 0, %s41
      %s45 = sphi 0, %s44
      %s61 = sphi 0, %s45
      %s69 = sphi 0, %s71
      %s72 = sphi 0, %s69
      %s73 = sphi 0, %s72
      %s89 = sphi 0, %s73
      %s97 = sphi 0, %s99
      %s100 = sphi 0, %s97
      %s101 = sphi 0, %s100
      %s117 = sphi 0, %s101
    $region4: #{tpu_custom_call.1} parent=1 // loop_header_branch
      %20 = sbr.rel (%p18) target = $region8
    $region5: #{tpu_custom_call.1} parent=1 // loop_body
      %s22 = ssub.s32 %s17, 1
      %s23 = ssub.s32 %s17, 2
      %s30 = sadd.s32 1, %s25
      %p31 = scmp.ge.s32.totalorder %s30, 1
      %s32 = scalar_select %p31, 0, %s30
      %s33 = sadd.s32 1, %s24
      %s34 = scalar_select %p31, %s33, %s24
      %p35 = scmp.ge.s32.totalorder %s34, 2
      %s36 = scalar_select %p35, 0, %s34
      %s37 = ssub.s32 %s24, %s36
      %s38 = ssub.s32 %s25, %s32
      %s39 = sor.u32 %s37, %s38
      %p40 = scmp.eq.s32.totalorder %s39, 0
      %s42 = sadd.s32 %s41, 1
      %s43 = scalar_select %p40, %s41, %s42
      %p46 = pneg %p40
      %p47 = scmp.eq.s32.totalorder %s17, 1
      %p48 = por %p46, %p47
      %p49 = scmp.ne.s32.totalorder %s41, %s44
      %p50 = scmp.eq.s32.totalorder %s17, 0
      %p51 = por %p49, %p50
      %p52 = scmp.ne.s32.totalorder %s41, %s44
      %p53 = scmp.eq.s32.totalorder %s22, 1
      %p54 = por %p52, %p53
      %p55 = scmp.ne.s32.totalorder %s44, %s45
      %p56 = scmp.eq.s32.totalorder %s22, 0
      %p57 = por %p55, %p56
      %p58 = scmp.ne.s32.totalorder %s44, %s45
      %p59 = scmp.eq.s32.totalorder %s23, 1
      %p60 = por %p58, %p59
      %p62 = scmp.ne.s32.totalorder %s45, %s61
      %p63 = scmp.eq.s32.totalorder %s23, 0
      %p64 = por %p62, %p63
      %s65 = ssub.s32 %s24, %s36
      %s66 = ssub.s32 %s25, %s32
      %s67 = sor.u32 %s65, %s66
      %p68 = scmp.eq.s32.totalorder %s67, 0
      %s70 = sadd.s32 %s69, 1
      %s71 = scalar_select %p68, %s69, %s70
      %p74 = pneg %p68
      %p75 = scmp.eq.s32.totalorder %s17, 1
      %p76 = por %p74, %p75
      %p77 = scmp.ne.s32.totalorder %s69, %s72
      %p78 = scmp.eq.s32.totalorder %s17, 0
      %p79 = por %p77, %p78
      %p80 = scmp.ne.s32.totalorder %s69, %s72
      %p81 = scmp.eq.s32.totalorder %s22, 1
      %p82 = por %p80, %p81
      %p83 = scmp.ne.s32.totalorder %s72, %s73
      %p84 = scmp.eq.s32.totalorder %s22, 0
      %p85 = por %p83, %p84
      %p86 = scmp.ne.s32.totalorder %s72, %s73
      %p87 = scmp.eq.s32.totalorder %s23, 1
      %p88 = por %p86, %p87
      %p90 = scmp.ne.s32.totalorder %s73, %s89
      %p91 = scmp.eq.s32.totalorder %s23, 0
      %p92 = por %p90, %p91
      %s93 = ssub.s32 %s24, %s36
      %s94 = ssub.s32 %s25, %s32
      %s95 = sor.u32 %s93, %s94
      %p96 = scmp.eq.s32.totalorder %s95, 0
      %s98 = sadd.s32 %s97, 1
      %s99 = scalar_select %p96, %s97, %s98
      %p102 = pneg %p96
      %p103 = scmp.eq.s32.totalorder %s17, 1
      %p104 = por %p102, %p103
      %p105 = scmp.ne.s32.totalorder %s97, %s100
      %p106 = scmp.eq.s32.totalorder %s17, 0
      %p107 = por %p105, %p106
      %p108 = scmp.ne.s32.totalorder %s97, %s100
      %p109 = scmp.eq.s32.totalorder %s22, 1
      %p110 = por %p108, %p109
      %p111 = scmp.ne.s32.totalorder %s100, %s101
      %p112 = scmp.eq.s32.totalorder %s22, 0
      %p113 = por %p111, %p112
      %p114 = scmp.ne.s32.totalorder %s100, %s101
      %p115 = scmp.eq.s32.totalorder %s23, 1
      %p116 = por %p114, %p115
      %p118 = scmp.ne.s32.totalorder %s101, %s117
      %p119 = scmp.eq.s32.totalorder %s23, 0
      %p120 = por %p118, %p119
      %p121 = scmp.le.s32.totalorder 1, %s17
      %p122 = scmp.lt.s32.totalorder %s17, 3
      %p123 = pnand %p121, %p122
      %p124 = pneg %p123
      // Predicated region
      $region9: #{tpu_custom_call.1} parent=5 // pred_check
        _
      $region10: #{tpu_custom_call.1} parent=5 // pred_check_branch
        %126 = sbr.rel (%p123) target = $region12
      $region11: #{tpu_custom_call.1} parent=5 // pred_region
        %s127 = ssub.s32 %s17, 1
      $region12: #{tpu_custom_call.1} parent=5 // pred_fallthru
        _
      %p128 = scmp.lt.s32.totalorder %s17, 2
      // Predicated region
      $region13: #{tpu_custom_call.1} parent=5 // pred_check
        %p129 = pneg %p128
      $region14: #{tpu_custom_call.1} parent=5 // pred_check_branch
        %131 = sbr.rel (%p129) target = $region16
      $region15: #{tpu_custom_call.1} parent=5 // pred_region
        // Predicated region
        $region17: #{tpu_custom_call.1} parent=15 // pred_check
          %p132 = pneg %p51
        $region18: #{tpu_custom_call.1} parent=15 // pred_check_branch
          %134 = sbr.rel (%p132) target = $region20
        $region19: #{tpu_custom_call.1} parent=15 // pred_region
          %s135 = sand.u32 %s41, 1
          %s136 = scalar_lea.sflag [#allocation3], %s135
          %s137 = sand.u32 %s41, 1
          %s138 = smul.addr %s137, 16
          %s139 = scalar_lea.vmem [#allocation2], %s138
          %s140 = smul.u32 2, %s25
          %s142 = ssub.s32 256, 256
          %143 = vsyncadd %s136, %s142
          %s144 = smul.addr %s24, 2
          %s145 = sadd.s32 %s140, %s144
          %s146 = smul.addr %s145, 128
          %s147 = scalar_lea.hbm %s0, %s146
          %s148 = sshll.u32 %s139, 4
          %s149 = int_to_ptr.vmem [resolvable:$true] %s148
          %154 = dma.hbm_to_vmem [thread:$0]  %s147, 256, %s149, %s136, 128, 128, 8
        $region20: #{tpu_custom_call.1} parent=15 // pred_fallthru
          _
        // Predicated region
        $region21: #{tpu_custom_call.1} parent=15 // pred_check
          %p155 = pneg %p79
        $region22: #{tpu_custom_call.1} parent=15 // pred_check_branch
          %157 = sbr.rel (%p155) target = $region24
        $region23: #{tpu_custom_call.1} parent=15 // pred_region
          %s158 = sand.u32 %s69, 1
          %s159 = scalar_lea.sflag [#allocation6], %s158
          %s160 = sand.u32 %s69, 1
          %s161 = smul.addr %s160, 2
          %s162 = scalar_lea.vmem [#allocation5], %s161
          %s164 = ssub.s32 32, 32
          %165 = vsyncadd %s159, %s164
          %s166 = sadd.s32 %s25, %s24
          %s167 = smul.addr %s166, 32
          %s168 = scalar_lea.hbm %s1, %s167
          %s170 = sshll.u32 %s162, 4
          %s171 = int_to_ptr.vmem [resolvable:$true] %s170
          %173 = dma.hbm_to_vmem [thread:$0]  %s168, 32, %s171, %s159
        $region24: #{tpu_custom_call.1} parent=15 // pred_fallthru
          _
      $region16: #{tpu_custom_call.1} parent=5 // pred_fallthru
        _
      %p174 = scmp.le.s32.totalorder 1, %s17
      %p175 = scmp.lt.s32.totalorder %s17, 3
      %p176 = pnand %p174, %p175
      %p177 = pneg %p176
      // Predicated region
      $region25: #{tpu_custom_call.1} parent=5 // pred_check
        _
      $region26: #{tpu_custom_call.1} parent=5 // pred_check_branch
        %179 = sbr.rel (%p176) target = $region28
      $region27: #{tpu_custom_call.1} parent=5 // pred_region
        %s180 = ssub.s32 %s17, 1
        %s181 = sand.u32 %s44, 1
        %s182 = scalar_lea.sflag [#allocation3], %s181
        %s183 = sand.u32 %s44, 1
        %s184 = smul.addr %s183, 16
        %s185 = scalar_lea.vmem [#allocation2], %s184
        // Predicated region
        $region29: #{tpu_custom_call.1} parent=27 // pred_check
          %p186 = pneg %p57
        $region30: #{tpu_custom_call.1} parent=27 // pred_check_branch
          %188 = sbr.rel (%p186) target = $region32
        $region31: #{tpu_custom_call.1} parent=27 // pred_region
          %189 = dma.done %s182, 256
        $region32: #{tpu_custom_call.1} parent=27 // pred_fallthru
          _
        %s190 = sand.u32 %s72, 1
        %s191 = scalar_lea.sflag [#allocation6], %s190
        %s192 = sand.u32 %s72, 1
        %s193 = smul.addr %s192, 2
        %s194 = scalar_lea.vmem [#allocation5], %s193
        // Predicated region
        $region33: #{tpu_custom_call.1} parent=27 // pred_check
          %p195 = pneg %p85
        $region34: #{tpu_custom_call.1} parent=27 // pred_check_branch
          %197 = sbr.rel (%p195) target = $region36
        $region35: #{tpu_custom_call.1} parent=27 // pred_region
          %198 = dma.done %s191, 32
        $region36: #{tpu_custom_call.1} parent=27 // pred_fallthru
          _
        %s199 = sand.u32 %s44, 1
        %s200 = scalar_lea.sflag [#allocation3], %s199
        %s201 = sand.u32 %s44, 1
        %s202 = smul.addr %s201, 16
        %s203 = scalar_lea.vmem [#allocation2], %s202
        %p204 = pneg %p57
        %p205 = pneg %p54
        %s206 = sand.u32 %s72, 1
        %s207 = scalar_lea.sflag [#allocation6], %s206
        %s208 = sand.u32 %s72, 1
        %s209 = smul.addr %s208, 2
        %s210 = scalar_lea.vmem [#allocation5], %s209
        %p211 = pneg %p85
        %p212 = pneg %p82
        %p213 = pneg %p113
        %p214 = pneg %p110
        %s215 = sand.u32 %s100, 1
        %s216 = scalar_lea.sflag [#allocation4], %s215
        %s217 = sand.u32 %s100, 1
        %s218 = smul.addr %s217, 16
        %s219 = scalar_lea.vmem [#allocation7], %s218
        %s220 = smul.u32 2, %s27
        %s221 = smul.u32 2, %s27
        %v222 = vlaneseq
        %v223 = vand.u32 %v222, 127
        %vm224 = vcmp.eq.s32.totalorder %v223, 0
        %vm225 = vcmp.eq.s32.totalorder %v223, 15
        %v226 = vld [vmem:[%s185] sm:$0xff]
        %v227 = vld [vmem:[%s185 + $0x8] sm:$0xff]
        %v228 = vrot.slane %v226, 7
        %v229 = vrot.slane %v227, 7
        %v230 = vlaneseq
        %v231 = vshrl.u32 %v230, 7
        %vm232 = vcmp.lt.s32.totalorder %v231, 1
        %v233 = vsel %vm232, %v228, %v229
        %v234 = vsel %vm232, %v229, %v228
        %v235 = vrot.slane %v226, 1
        %v236 = vrot.slane %v227, 1
        %vm237 = vcmp.lt.s32.totalorder %v231, 7
        %v238 = vsel %vm237, %v235, %v236
        %v239 = vsel %vm237, %v236, %v235
        %v240 = vsub.f32 %v234, %v238
        %v241 = vsub.f32 %v233, %v239
        %v242 = vmul.f32 %v226, 2.0
        %v243 = vmul.f32 %v227, 2.0
        %v244 = vadd.f32 %v234, %v242
        %v245 = vadd.f32 %v233, %v243
        %v246 = vadd.f32 %v244, %v238
        %v247 = vadd.f32 %v245, %v239
        %vm248 = vcmask 1047680
        %249 = vrot.lane.b32.xlu0 %v240, 16
        %v250 = vpop.permute.xlu0 %249
        %v251 = vsel %vm248, %v250, %v240
        %252 = vrot.lane.b32.xlu0 %v241, 16
        %v253 = vpop.permute.xlu0 %252
        %v254 = vsel %vm248, %v253, %v241
        %255 = vrot.lane.b32.xlu0 %v251, 16
        %v256 = vpop.permute.xlu0 %255
        %257 = vrot.lane.b32.xlu0 %v254, 16
        %v258 = vpop.permute.xlu0 %257
        %v259 = vsel %vm248, %v256, %v240
        %v260 = vsel %vm248, %v258, %v241
        %v261 = vsel %vm224, 1, 0
        %vm262 = vcmp.eq.s32.totalorder %v261, 1
        %265 = vrot.lane.b32.xlu0 %v259, 113
        %v266 = vpop.permute.xlu0 %265
        %267 = vrot.lane.b32.xlu0 %v260, 113
        %v268 = vpop.permute.xlu0 %267
        %v271 = vsel %vm262, 0.0, %v266
        %v272 = vsel %vm262, 0.0, %v268
        %v273 = vsel %vm225, 1, 0
        %vm274 = vcmp.eq.s32.totalorder %v273, 1
        %275 = vrot.lane.b32.xlu0 %v259, 127
        %v276 = vpop.permute.xlu0 %275
        %277 = vrot.lane.b32.xlu0 %v260, 127
        %v278 = vpop.permute.xlu0 %277
        %v281 = vsel %vm274, 0.0, %v276
        %v282 = vsel %vm274, 0.0, %v278
        %283 = vrot.lane.b32.xlu0 %v246, 16
        %v284 = vpop.permute.xlu0 %283
        %v285 = vsel %vm248, %v284, %v246
        %286 = vrot.lane.b32.xlu0 %v247, 16
        %v287 = vpop.permute.xlu0 %286
        %v288 = vsel %vm248, %v287, %v247
        %289 = vrot.lane.b32.xlu0 %v285, 16
        %v290 = vpop.permute.xlu0 %289
        %291 = vrot.lane.b32.xlu0 %v288, 16
        %v292 = vpop.permute.xlu0 %291
        %v293 = vsel %vm248, %v290, %v246
        %v294 = vsel %vm248, %v292, %v247
        %297 = vrot.lane.b32.xlu0 %v293, 113
        %v298 = vpop.permute.xlu0 %297
        %299 = vrot.lane.b32.xlu0 %v294, 113
        %v300 = vpop.permute.xlu0 %299
        %v303 = vsel %vm262, 0.0, %v298
        %v304 = vsel %vm262, 0.0, %v300
        %305 = vrot.lane.b32.xlu0 %v293, 127
        %v306 = vpop.permute.xlu0 %305
        %307 = vrot.lane.b32.xlu0 %v294, 127
        %v308 = vpop.permute.xlu0 %307
        %v311 = vsel %vm274, 0.0, %v306
        %v312 = vsel %vm274, 0.0, %v308
        %v313 = vmul.f32 %v240, 2.0
        %v314 = vmul.f32 %v241, 2.0
        %v315 = vadd.f32 %v271, %v313
        %v316 = vadd.f32 %v272, %v314
        %v317 = vadd.f32 %v315, %v281
        %v318 = vadd.f32 %v316, %v282
        %v319 = vsub.f32 %v303, %v311
        %v320 = vsub.f32 %v304, %v312
        %v321 = vmul.f32 %v317, %v317
        %v322 = vmul.f32 %v318, %v318
        %v323 = vmul.f32 %v319, %v319
        %v324 = vmul.f32 %v320, %v320
        %v325 = vadd.f32 %v321, %v323
        %v326 = vadd.f32 %v322, %v324
        %v327 = vrsqrt.pop %v325
        %v328 = vmul.f32 %v325, %v327
        %vm329 = vcmp.eq.f32.partialorder %v325, inf
        %v330 = vsel %vm329, %v325, %v328
        %vm331 = vcmp.eq.f32.partialorder %v325, 0.0
        %v332 = vand.u32 %v325, 2147483648
        %v333 = vsel %vm331, %v332, %v330
        %v334 = vrsqrt.pop %v326
        %v335 = vmul.f32 %v326, %v334
        %vm336 = vcmp.eq.f32.partialorder %v326, inf
        %v337 = vsel %vm336, %v326, %v335
        %vm338 = vcmp.eq.f32.partialorder %v326, 0.0
        %v339 = vand.u32 %v326, 2147483648
        %v340 = vsel %vm338, %v339, %v337
        %vm341 = vcmask 130048
        %342 = vst.msk [vmem:[%s219] sm:$0xff] %vm341, %v333
        %343 = vst.msk [vmem:[%s219 + $0x8] sm:$0xff] %vm341, %v340
        %v344 = vld [vmem:[%s194] sm:$0x1]
        %v345 = vld [vmem:[%s194 + $0x1] sm:$0x1]
        %v346 = vld [vmem:[%s185] sm:$0x1]
        %v347 = vld [vmem:[%s185 + $0x1] sm:$0x1]
        %v348 = vsub.f32 %v344, %v347
        %v349 = vmul.f32 %v346, 2.0
        %v350 = vadd.f32 %v344, %v349
        %v351 = vadd.f32 %v350, %v347
        %352 = vrot.lane.b32.xlu0 %v348, 16
        %v353 = vpop.permute.xlu0 %352
        %v354 = vsel %vm248, %v353, %v348
        %355 = vrot.lane.b32.xlu0 %v354, 16
        %v356 = vpop.permute.xlu0 %355
        %v357 = vsel %vm248, %v356, %v348
        %359 = vrot.lane.b32.xlu0 %v357, 113
        %v360 = vpop.permute.xlu0 %359
        %v362 = vsel %vm224, 0.0, %v360
        %363 = vrot.lane.b32.xlu0 %v357, 127
        %v364 = vpop.permute.xlu0 %363
        %v366 = vsel %vm225, 0.0, %v364
        %367 = vrot.lane.b32.xlu0 %v351, 16
        %v368 = vpop.permute.xlu0 %367
        %v369 = vsel %vm248, %v368, %v351
        %370 = vrot.lane.b32.xlu0 %v369, 16
        %v371 = vpop.permute.xlu0 %370
        %v372 = vsel %vm248, %v371, %v351
        %374 = vrot.lane.b32.xlu0 %v372, 113
        %v375 = vpop.permute.xlu0 %374
        %v377 = vsel %vm224, 0.0, %v375
        %378 = vrot.lane.b32.xlu0 %v372, 127
        %v379 = vpop.permute.xlu0 %378
        %v381 = vsel %vm225, 0.0, %v379
        %v382 = vmul.f32 %v348, 2.0
        %v383 = vadd.f32 %v362, %v382
        %v384 = vadd.f32 %v383, %v366
        %v385 = vsub.f32 %v377, %v381
        %v386 = vmul.f32 %v384, %v384
        %v387 = vmul.f32 %v385, %v385
        %v388 = vadd.f32 %v386, %v387
        %v389 = vrsqrt.pop %v388
        %v390 = vmul.f32 %v388, %v389
        %vm391 = vcmp.eq.f32.partialorder %v388, inf
        %v392 = vsel %vm391, %v388, %v390
        %vm393 = vcmp.eq.f32.partialorder %v388, 0.0
        %v394 = vand.u32 %v388, 2147483648
        %v395 = vsel %vm393, %v394, %v392
        %vm396 = vcmask 122880
        %397 = vst.msk [vmem:[%s219] sm:$0x1] %vm396, %v395
        %v398 = vld [vmem:[%s185 + $0xe] sm:$0x1]
        %v399 = vld [vmem:[%s185 + $0xf] sm:$0x1]
        %v400 = vsub.f32 %v398, %v345
        %v401 = vmul.f32 %v399, 2.0
        %v402 = vadd.f32 %v398, %v401
        %v403 = vadd.f32 %v402, %v345
        %404 = vrot.lane.b32.xlu0 %v400, 16
        %v405 = vpop.permute.xlu0 %404
        %v406 = vsel %vm248, %v405, %v400
        %407 = vrot.lane.b32.xlu0 %v406, 16
        %v408 = vpop.permute.xlu0 %407
        %v409 = vsel %vm248, %v408, %v400
        %411 = vrot.lane.b32.xlu0 %v409, 113
        %v412 = vpop.permute.xlu0 %411
        %v414 = vsel %vm224, 0.0, %v412
        %415 = vrot.lane.b32.xlu0 %v409, 127
        %v416 = vpop.permute.xlu0 %415
        %v418 = vsel %vm225, 0.0, %v416
        %419 = vrot.lane.b32.xlu0 %v403, 16
        %v420 = vpop.permute.xlu0 %419
        %v421 = vsel %vm248, %v420, %v403
        %422 = vrot.lane.b32.xlu0 %v421, 16
        %v423 = vpop.permute.xlu0 %422
        %v424 = vsel %vm248, %v423, %v403
        %426 = vrot.lane.b32.xlu0 %v424, 113
        %v427 = vpop.permute.xlu0 %426
        %v429 = vsel %vm224, 0.0, %v427
        %430 = vrot.lane.b32.xlu0 %v424, 127
        %v431 = vpop.permute.xlu0 %430
        %v433 = vsel %vm225, 0.0, %v431
        %v434 = vmul.f32 %v400, 2.0
        %v435 = vadd.f32 %v414, %v434
        %v436 = vadd.f32 %v435, %v418
        %v437 = vsub.f32 %v429, %v433
        %v438 = vmul.f32 %v436, %v436
        %v439 = vmul.f32 %v437, %v437
        %v440 = vadd.f32 %v438, %v439
        %v441 = vrsqrt.pop %v440
        %v442 = vmul.f32 %v440, %v441
        %vm443 = vcmp.eq.f32.partialorder %v440, inf
        %v444 = vsel %vm443, %v440, %v442
        %vm445 = vcmp.eq.f32.partialorder %v440, 0.0
        %v446 = vand.u32 %v440, 2147483648
        %v447 = vsel %vm445, %v446, %v444
        %448 = vst.msk [vmem:[%s219 + $0xf] sm:$0x1] %vm396, %v447
        %s449 = sand.u32 %s100, 1
        %s450 = scalar_lea.sflag [#allocation4], %s449
        %s451 = sand.u32 %s100, 1
        %s452 = smul.addr %s451, 16
        %s453 = scalar_lea.vmem [#allocation7], %s452
        // Predicated region
        $region37: #{tpu_custom_call.1} parent=27 // pred_check
          %p454 = pneg %p110
        $region38: #{tpu_custom_call.1} parent=27 // pred_check_branch
          %456 = sbr.rel (%p454) target = $region40
        $region39: #{tpu_custom_call.1} parent=27 // pred_region
          %s457 = smul.u32 2, %s27
          %s459 = ssub.s32 256, 256
          %460 = vsyncadd %s450, %s459
          %s461 = smul.addr %s26, 2
          %s462 = sadd.s32 %s457, %s461
          %s463 = smul.addr %s462, 128
          %s464 = scalar_lea.hbm %s2, %s463
          %s465 = sshll.u32 %s453, 4
          %s466 = int_to_ptr.vmem [resolvable:$true] %s465
          %471 = dma.vmem_to_hbm [thread:$0]  %s466, 256, %s464, %s450, 128, 128, 8
        $region40: #{tpu_custom_call.1} parent=27 // pred_fallthru
          _
      $region28: #{tpu_custom_call.1} parent=5 // pred_fallthru
        _
      %p472 = scmp.le.s32.totalorder 2, %s17
      // Predicated region
      $region41: #{tpu_custom_call.1} parent=5 // pred_check
        %p473 = pneg %p472
      $region42: #{tpu_custom_call.1} parent=5 // pred_check_branch
        %475 = sbr.rel (%p473) target = $region44
      $region43: #{tpu_custom_call.1} parent=5 // pred_region
        %s476 = ssub.s32 %s17, 2
        // Predicated region
        $region45: #{tpu_custom_call.1} parent=43 // pred_check
          %p477 = pneg %p116
        $region46: #{tpu_custom_call.1} parent=43 // pred_check_branch
          %479 = sbr.rel (%p477) target = $region48
        $region47: #{tpu_custom_call.1} parent=43 // pred_region
          %s480 = sand.u32 %s101, 1
          %s481 = scalar_lea.sflag [#allocation4], %s480
          %s482 = sand.u32 %s101, 1
          %s483 = smul.addr %s482, 16
          %s484 = scalar_lea.vmem [#allocation7], %s483
          %485 = dma.done %s481, 256
        $region48: #{tpu_custom_call.1} parent=43 // pred_fallthru
          _
      $region44: #{tpu_custom_call.1} parent=5 // pred_fallthru
        _
    $region6: #{tpu_custom_call.1} parent=1 // loop_footer
      %s21 = sadd.s32 1, %s17
    $region7: #{tpu_custom_call.1} parent=1 // loop_footer_branch
      %16 = sbr.rel target = $region3
    $region8: #{tpu_custom_call.1} parent=1 // loop_exit
      _
    %486 = vsyncpa [#allocation3], 1
    %s487 = scalar_lea.sflag [#allocation3], 1
    %488 = vsyncpa %s487, 1
    %489 = vsyncpa [#allocation6], 1
    %s490 = scalar_lea.sflag [#allocation6], 1
    %491 = vsyncpa %s490, 1
    %492 = vsyncpa [#allocation4], 1
    %s493 = scalar_lea.sflag [#allocation4], 1
    %494 = vsyncpa %s493, 1

</llo_original>
